<compile_context>
chip_gen: v6e
topology: v6e:2x2x1
jax: 0.10.0
libtpu: 0.0.40
codegen_flags: <defaults>
</compile_context>

<pallas_src>
import functools

import jax
import jax.numpy as jnp
import numpy as np
from jax.experimental import pallas as pl
from jax.experimental.pallas import tpu as pltpu

_VMEM_LIMIT = 32 * 1024 * 1024  # explicit scoped-VMEM limit (safe headroom on v7x's 64 MiB)


def _pick_tile(m, target=512):
    """Largest divisor of m that is <= target and a multiple of 8, else m (full dim)."""
    for t in range(min(target, m), 7, -1):
        if m % t == 0 and t % 8 == 0:
            return t
    return m


# ----------------------------- Pallas kernels ------------------------------

def _matmul_bias_kernel(x_ref, w_ref, b_ref, o_ref):
    acc = jnp.dot(x_ref[...].astype(jnp.bfloat16), w_ref[...],
                  preferred_element_type=jnp.float32)
    o_ref[...] = acc + b_ref[...]


def _matmul_bias_res_kernel(x_ref, w_ref, b_ref, r_ref, o_ref):
    acc = jnp.dot(x_ref[...].astype(jnp.bfloat16), w_ref[...],
                  preferred_element_type=jnp.float32)
    o_ref[...] = acc + b_ref[...] + r_ref[...]


def _flash_attn_kernel(q_ref, k_ref, v_ref, o_ref, m_sc, l_sc, acc_sc, *, scale):
    """Online-softmax attention tile: q (tq,dk), k (tk,dk), v (tk,dv)."""
    ki = pl.program_id(1)

    @pl.when(ki == 0)
    def _():
        m_sc[...] = jnp.full_like(m_sc, -jnp.inf)
        l_sc[...] = jnp.zeros_like(l_sc)
        acc_sc[...] = jnp.zeros_like(acc_sc)

    q = (q_ref[...] * jnp.float32(1.0 / scale)).astype(jnp.bfloat16)
    k = k_ref[...].astype(jnp.bfloat16)
    # contract last dims of q and k directly (no host-side k.T)
    s = jax.lax.dot_general(q, k, (((1,), (1,)), ((), ())),
                            preferred_element_type=jnp.float32)        # (tq, tk)

    m_prev = m_sc[...]
    m_new = jnp.maximum(m_prev, jnp.max(s, axis=-1, keepdims=True))
    alpha = jnp.exp(m_prev - m_new)
    p = jnp.exp(s - m_new)
    l_sc[...] = alpha * l_sc[...] + jnp.sum(p, axis=-1, keepdims=True)
    acc_sc[...] = alpha * acc_sc[...] + jnp.dot(
        p.astype(jnp.bfloat16), v_ref[...].astype(jnp.bfloat16),
        preferred_element_type=jnp.float32)
    m_sc[...] = m_new

    @pl.when(ki == pl.num_programs(1) - 1)
    def _():
        o_ref[...] = (acc_sc[...] * pl.reciprocal(l_sc[...], approx=True)
                      ).astype(o_ref.dtype)


# ----------------------------- Pallas wrappers ------------------------------

def matmul_bias(x, w, b, res=None, tm_target=512):
    """(M,K) @ (K,N) + b[N]  (+ res[M,N]), M-tiled & pipelined, bf16 MXU / f32 acc."""
    M, K = x.shape
    N = w.shape[1]
    tm = _pick_tile(M, tm_target)
    grid = (M // tm,)
    w_bf = w.astype(jnp.bfloat16)
    b2 = b.reshape(1, N).astype(jnp.float32)

    in_specs = [pl.BlockSpec((tm, K), lambda i: (i, 0)),
                pl.BlockSpec((K, N), lambda i: (0, 0)),
                pl.BlockSpec((1, N), lambda i: (0, 0))]
    args = [x, w_bf, b2]
    if res is None:
        kern = _matmul_bias_kernel
    else:
        in_specs.append(pl.BlockSpec((tm, N), lambda i: (i, 0)))
        args.append(res)
        kern = _matmul_bias_res_kernel

    return pl.pallas_call(
        kern,
        out_shape=jax.ShapeDtypeStruct((M, N), jnp.float32),
        grid=grid,
        in_specs=in_specs,
        out_specs=pl.BlockSpec((tm, N), lambda i: (i, 0)),
        compiler_params=pltpu.CompilerParams(
            dimension_semantics=("parallel",),
            vmem_limit_bytes=_VMEM_LIMIT),
    )(*args)


def flash_attention(q, k, v, scale, tq_target=512, tk_target=512):
    """softmax(q k^T / scale) v over the full flattened key set (flash-style tiled)."""
    Mq, dk = q.shape
    Mk, dv = v.shape
    tq = _pick_tile(Mq, tq_target)
    tk = _pick_tile(Mk, tk_target)
    grid = (Mq // tq, Mk // tk)
    kern = functools.partial(_flash_attn_kernel, scale=scale)
    return pl.pallas_call(
        kern,
        out_shape=jax.ShapeDtypeStruct((Mq, dv), jnp.float32),
        grid=grid,
        in_specs=[pl.BlockSpec((tq, dk), lambda qi, ki: (qi, 0)),
                  pl.BlockSpec((tk, dk), lambda qi, ki: (ki, 0)),
                  pl.BlockSpec((tk, dv), lambda qi, ki: (ki, 0))],
        out_specs=pl.BlockSpec((tq, dv), lambda qi, ki: (qi, 0)),
        scratch_shapes=[pltpu.VMEM((tq, 1), jnp.float32),
                        pltpu.VMEM((tq, 1), jnp.float32),
                        pltpu.VMEM((tq, dv), jnp.float32)],
        compiler_params=pltpu.CompilerParams(
            dimension_semantics=("parallel", "arbitrary"),
            vmem_limit_bytes=_VMEM_LIMIT),
    )(q, k, v)


# -------------------- sub-pixel transposed-conv preparation ------------------
# ConvTranspose2d(k=3, s=2, p=1, output_padding=1): output[2m+dy, 2n+dx] only depends
# on x[m+ty, n+tx] for ty,tx in {0,1} via kernel tap (kh,kw) = (dy+1-2ty, dx+1-2tx)
# when that tap is in range.  So the whole deconv is ONE matmul:
#   (B*H*W, Cin*4) patches  @  (Cin*4, 4*Cout) phase-packed weights.

def _subpixel_weight(w):
    """w: (Cin, Cout, 3, 3) PyTorch ConvTranspose2d layout -> (Cin*4, 4*Cout)."""
    Cin, Cout = w.shape[0], w.shape[1]
    wm = jnp.zeros((Cin, 4, 4, Cout), jnp.float32)
    for ty in range(2):
        for tx in range(2):
            t = ty * 2 + tx
            for dy in range(2):
                for dx in range(2):
                    kh = dy + 1 - 2 * ty
                    kw = dx + 1 - 2 * tx
                    if 0 <= kh <= 2 and 0 <= kw <= 2:
                        p = dy * 2 + dx
                        wm = wm.at[:, t, p, :].set(w[:, :, kh, kw])
    return wm.reshape(Cin * 4, 4 * Cout)


def _subpixel_patches(x_nhwc):
    """x: (B,H,W,Cin) -> (B*H*W, Cin*4); tap t=ty*2+tx reads x[m+ty, n+tx] (zero pad)."""
    B, H, W, Cin = x_nhwc.shape
    xp = jnp.pad(x_nhwc, ((0, 0), (0, 1), (0, 1), (0, 0)))
    taps = [xp[:, ty:ty + H, tx:tx + W, :] for ty in range(2) for tx in range(2)]
    patches = jnp.stack(taps, axis=-1)            # (B, H, W, Cin, 4)
    return patches.reshape(B * H * W, Cin * 4)


# ------------------------------ forward pass --------------------------------

def upsampling_block_forward(x, params, num_heads):
    B, Cin, H, W = x.shape
    Ho, Wo = 2 * H, 2 * W
    Cout = params['deconv_b'].shape[0]
    kf = params['q_b'].shape[0]
    vf = params['v_b'].shape[0]
    Ctot = Cout + kf

    x_nhwc = x.transpose(0, 2, 3, 1)                       # (B,H,W,Cin)
    x_flat = x_nhwc.reshape(B * H * W, Cin)

    # ---- fused (deconv residual + Q) transposed conv via sub-pixel decomposition ----
    w_dq = jnp.concatenate([params['deconv_w'], params['q_w']], axis=1)   # (Cin, Ctot, 3,3)
    b_dq = jnp.concatenate([params['deconv_b'], params['q_b']])
    wm = _subpixel_weight(w_dq)                            # (Cin*4, 4*Ctot)
    bm = jnp.tile(b_dq, 4)                                 # phase-major bias
    patches = _subpixel_patches(x_nhwc)                    # (B*H*W, Cin*4)
    y = matmul_bias(patches, wm, bm)                       # (B*H*W, 4*Ctot)
    y = (y.reshape(B, H, W, 2, 2, Ctot)
           .transpose(0, 1, 3, 2, 4, 5)
           .reshape(B, Ho, Wo, Ctot))                      # sub-pixel shuffle
    res_flat = y[..., :Cout].reshape(B * Ho * Wo, Cout)
    q_flat = y[..., Cout:].reshape(B * Ho * Wo, kf)

    # ---- fused K / V 1x1 projections ----
    wk = params['k_w'].reshape(kf, Cin).T                  # (Cin, kf)
    wv = params['v_w'].reshape(vf, Cin).T                  # (Cin, vf)
    wkv = jnp.concatenate([wk, wv], axis=1)                # (Cin, kf+vf)
    bkv = jnp.concatenate([params['k_b'], params['v_b']])
    kv_flat = matmul_bias(x_flat, wkv, bkv)                # (B*H*W, kf+vf)
    k_flat = kv_flat[:, :kf]
    v_flat = kv_flat[:, kf:]

    dk = kf // num_heads
    dv = vf // num_heads
    scale = float(dk) ** 0.5

    # split_heads + flatten(0,3): rows = (b, y, x, head), cols = per-head channels
    q = q_flat.reshape(B * Ho * Wo * num_heads, dk)
    k = k_flat.reshape(B * H * W * num_heads, dk)
    v = v_flat.reshape(B * H * W * num_heads, dv)

    # softmax over ALL keys (batch x spatial x head), matching the PyTorch code.
    # TODO(synk): nn.Dropout(p) on the attention matrix is train-time only; eval identity.
    o = flash_attention(q, k, v, scale)                    # (B*Ho*Wo*nh, dv)
    o_flat = o.reshape(B * Ho * Wo, vf)

    # outputTransform (1x1 conv) fused with the deconv residual add
    wo = params['out_w'].reshape(Cout, vf).T               # (vf, Cout)
    out_flat = matmul_bias(o_flat, wo, params['out_b'], res=res_flat)

    return out_flat.reshape(B, Ho, Wo, Cout).transpose(0, 3, 1, 2)   # back to NCHW


# ------------------------------ pure-JAX reference ---------------------------

def ref_forward(x, params, num_heads):
    prec = jax.lax.Precision.HIGHEST

    def conv_t_ref(x, w, b):
        wf = jnp.flip(w, (2, 3)).transpose(1, 0, 2, 3)     # (Cout, Cin, 3, 3)
        y = jax.lax.conv_general_dilated(
            x, wf, window_strides=(1, 1), padding=((1, 2), (1, 2)),
            lhs_dilation=(2, 2), dimension_numbers=('NCHW', 'OIHW', 'NCHW'),
            precision=prec)
        return y + b[None, :, None, None]

    def conv1_ref(x, w, b):
        y = jax.lax.conv_general_dilated(
            x, w, (1, 1), 'VALID', dimension_numbers=('NCHW', 'OIHW', 'NCHW'),
            precision=prec)
        return y + b[None, :, None, None]

    B, Cin, H, W = x.shape
    Ho, Wo = 2 * H, 2 * W
    res = conv_t_ref(x, params['deconv_w'], params['deconv_b'])
    q = conv_t_ref(x, params['q_w'], params['q_b'])
    k = conv1_ref(x, params['k_w'], params['k_b'])
    v = conv1_ref(x, params['v_w'], params['v_b'])
    kf, vf = q.shape[1], v.shape[1]
    dk, dv = kf // num_heads, vf // num_heads
    qm = q.transpose(0, 2, 3, 1).reshape(-1, dk) / (dk ** 0.5)
    km = k.transpose(0, 2, 3, 1).reshape(-1, dk)
    vm = v.transpose(0, 2, 3, 1).reshape(-1, dv)
    A = jax.nn.softmax(jnp.dot(qm, km.T, precision=prec), axis=1)
    O = jnp.dot(A, vm, precision=prec)
    O = O.reshape(B, Ho, Wo, vf).transpose(0, 3, 1, 2)
    O = conv1_ref(O, params['out_w'], params['out_b'])
    return res + O


# ---------------------------------- params ----------------------------------

def init_params(key, in_channel, key_filters, value_filters, output_filters):
    ks = jax.random.split(key, 10)

    def nrm(k, shape, s=0.1):
        return (s * jax.random.normal(k, shape)).astype(jnp.float32)

    return {
        # PyTorch ConvTranspose2d weight layout: (Cin, Cout, kH, kW)
        'deconv_w': nrm(ks[0], (in_channel, output_filters, 3, 3)),
        'deconv_b': nrm(ks[1], (output_filters,)),
        'q_w': nrm(ks[2], (in_channel, key_filters, 3, 3)),
        'q_b': nrm(ks[3], (key_filters,)),
        # PyTorch Conv2d weight layout: (Cout, Cin, 1, 1)
        'k_w': nrm(ks[4], (key_filters, in_channel, 1, 1)),
        'k_b': nrm(ks[5], (key_filters,)),
        'v_w': nrm(ks[6], (value_filters, in_channel, 1, 1)),
        'v_b': nrm(ks[7], (value_filters,)),
        'out_w': nrm(ks[8], (output_filters, value_filters, 1, 1)),
        'out_b': nrm(ks[9], (output_filters,)),
    }


if __name__ == "__main__":
    B, Cin, H, W = 2, 4, 16, 16
    key_filters, value_filters, output_filters, num_heads = 8, 8, 4, 2

    root = jax.random.PRNGKey(0)
    kx, kp = jax.random.split(root)
    x = jax.random.normal(kx, (B, Cin, H, W), dtype=jnp.float32)
    params = init_params(kp, Cin, key_filters, value_filters, output_filters)

    out = upsampling_block_forward(x, params, num_heads)
    out = jax.block_until_ready(out)

    ref = jax.block_until_ready(ref_forward(x, params, num_heads))

    assert out.shape == (B, output_filters, 2 * H, 2 * W), out.shape
    # bf16 MXU inputs + approx reciprocal vs. an f32 HIGHEST reference -> relaxed tolerance.
    np.testing.assert_allclose(np.asarray(out), np.asarray(ref), rtol=2e-2, atol=2e-2)
    print("KERNEL_OK")
</pallas_src>

<mosaic_0001>
module attributes {stable_mosaic.version = 11 : i64} {
  func.func @_matmul_bias_kernel(%arg0: i32, %arg1: memref<512x16xf32, #tpu.memory_space<vmem>>, %arg2: memref<16x48xbf16, #tpu.memory_space<vmem>>, %arg3: memref<1x48xf32, #tpu.memory_space<vmem>>, %arg4: memref<512x48xf32, #tpu.memory_space<vmem>>) attributes {dimension_semantics = [#tpu.dimension_semantics<parallel>], iteration_bounds = array<i64: 1>, scalar_prefetch = 0 : i64, scratch_operands = 0 : i64, tpu.core_type = #tpu.core_type<tc>, window_params = [{transform_indices = @transform_0, window_bounds = array<i64: 512, 16>}, {pipeline_mode = #tpu.pipeline_mode<synchronous>, transform_indices = @transform_1, window_bounds = array<i64: 16, 48>}, {pipeline_mode = #tpu.pipeline_mode<synchronous>, transform_indices = @transform_2, window_bounds = array<i64: 1, 48>}, {transform_indices = @transform_3, window_bounds = array<i64: 512, 48>}]} {
    %c0 = arith.constant 0 : index
    %c0_0 = arith.constant 0 : index
    %0 = vector.load %arg1[%c0, %c0_0] : memref<512x16xf32, #tpu.memory_space<vmem>>, vector<512x16xf32>
    %1 = arith.truncf %0 : vector<512x16xf32> to vector<512x16xbf16>
    %c0_1 = arith.constant 0 : index
    %c0_2 = arith.constant 0 : index
    %2 = vector.load %arg2[%c0_1, %c0_2] : memref<16x48xbf16, #tpu.memory_space<vmem>>, vector<16x48xbf16>
    %cst = arith.constant dense<0.000000e+00> : vector<512x48xf32>
    %3 = tpu.matmul %1, %2, %cst {dimension_numbers = #tpu.dot_dimension_numbers<[1], [0], [0], [1], [0, 0, 1, 1], [], []>} : vector<512x16xbf16>, vector<16x48xbf16>, vector<512x48xf32> -> vector<512x48xf32>
    %c0_3 = arith.constant 0 : index
    %c0_4 = arith.constant 0 : index
    %4 = vector.load %arg3[%c0_3, %c0_4] : memref<1x48xf32, #tpu.memory_space<vmem>>, vector<1x48xf32>
    %5 = vector.broadcast %4 : vector<1x48xf32> to vector<512x48xf32>
    %6 = arith.addf %3, %5 : vector<512x48xf32>
    %c0_5 = arith.constant 0 : index
    %c0_6 = arith.constant 0 : index
    %7 = vector.load %arg4[%c0_5, %c0_6] : memref<512x48xf32, #tpu.memory_space<vmem>>, vector<512x48xf32>
    tpu.vector_store %arg4[%c0_5, %c0_6], %6 {strides = array<i32>} : memref<512x48xf32, #tpu.memory_space<vmem>>, vector<512x48xf32>,
    return
  }
  func.func @transform_0(%arg0: i32) -> (i32, i32) {
    %c0_i32 = arith.constant 0 : i32
    %c0_i32_0 = arith.constant 0 : i32
    return %arg0, %c0_i32 : i32, i32
  }
  func.func @transform_1(%arg0: i32) -> (i32, i32) {
    %c0_i32 = arith.constant 0 : i32
    %c0_i32_0 = arith.constant 0 : i32
    %c0_i32_1 = arith.constant 0 : i32
    return %c0_i32, %c0_i32_0 : i32, i32
  }
  func.func @transform_2(%arg0: i32) -> (i32, i32) {
    %c0_i32 = arith.constant 0 : i32
    %c0_i32_0 = arith.constant 0 : i32
    %c0_i32_1 = arith.constant 0 : i32
    return %c0_i32, %c0_i32_0 : i32, i32
  }
  func.func @transform_3(%arg0: i32) -> (i32, i32) {
    %c0_i32 = arith.constant 0 : i32
    %c0_i32_0 = arith.constant 0 : i32
    return %arg0, %c0_i32 : i32, i32
  }
}

</mosaic_0001>

<llo_original>
// kernel: tpu_custom_call.1
$region0: #{tpu_custom_call.1}
  #allocation0 [shape = 'u32[]', space=smem, size = 0x4, offset = 0x4, fixed_abs, tag = 'smem constant byte address 0x4 - core index']
  #allocation1 [shape = 'u32[144,128]{1,0:T(1,128)}', space=vmem, size = 0x12000, scoped, tag = 'internal scratch']
  %s0 = inlined_call_operand.vmem [shape: f32[512,16], index: 0, kind: input, shape index: {}]
  %s1 = inlined_call_operand.vmem [shape: bf16[16,48], index: 1, kind: input, shape index: {}]
  %s2 = inlined_call_operand.vmem [shape: f32[1,48], index: 2, kind: input, shape index: {}]
  %s3 = inlined_call_operand.vmem [shape: f32[512,48], index: 3, kind: output, shape index: {}]
  %s4 = sld [smem:[#allocation0]]
  $region22: #{tpu_custom_call.1} parent=0
    _
  %s6 = ssub.s32 1, %s4
  %s7 = scalar_select 0, %s6, %s4
  // Predicated region
  $region2: #{tpu_custom_call.1} parent=0 // pred_check
    _
  $region3: #{tpu_custom_call.1} parent=0 // pred_check_branch
    %9 = sbr.rel (0) target = $region5
  $region4: #{tpu_custom_call.1} parent=0 // pred_region
    _
  $region5: #{tpu_custom_call.1} parent=0 // pred_fallthru
    _
  // Predicated region
  $region6: #{tpu_custom_call.1} parent=0 // pred_check
    _
  $region7: #{tpu_custom_call.1} parent=0 // pred_check_branch
    %11 = sbr.rel (0) target = $region9
  $region8: #{tpu_custom_call.1} parent=0 // pred_region
    _
  $region9: #{tpu_custom_call.1} parent=0 // pred_fallthru
    _
  // Predicated region
  $region10: #{tpu_custom_call.1} parent=0 // pred_check
    _
  $region11: #{tpu_custom_call.1} parent=0 // pred_check_branch
    %13 = sbr.rel (0) target = $region13
  $region12: #{tpu_custom_call.1} parent=0 // pred_region
    _
  $region13: #{tpu_custom_call.1} parent=0 // pred_fallthru
    _
  %v15 = vld [vmem:[%s0] sm:$0xff]
  %v16 = vld [vmem:[%s0 + $0x8] sm:$0xff]
  %v17 = vld [vmem:[%s0 + $0x10] sm:$0xff]
  %v18 = vld [vmem:[%s0 + $0x18] sm:$0xff]
  %v19 = vld [vmem:[%s0 + $0x20] sm:$0xff]
  %v20 = vld [vmem:[%s0 + $0x28] sm:$0xff]
  %v21 = vld [vmem:[%s0 + $0x30] sm:$0xff]
  %v22 = vld [vmem:[%s0 + $0x38] sm:$0xff]
  %v23 = vld [vmem:[%s0 + $0x40] sm:$0xff]
  %v24 = vld [vmem:[%s0 + $0x48] sm:$0xff]
  %v25 = vld [vmem:[%s0 + $0x50] sm:$0xff]
  %v26 = vld [vmem:[%s0 + $0x58] sm:$0xff]
  %v27 = vld [vmem:[%s0 + $0x60] sm:$0xff]
  %v28 = vld [vmem:[%s0 + $0x68] sm:$0xff]
  %v29 = vld [vmem:[%s0 + $0x70] sm:$0xff]
  %v30 = vld [vmem:[%s0 + $0x78] sm:$0xff]
  %v31 = vld [vmem:[%s0 + $0x80] sm:$0xff]
  %v32 = vld [vmem:[%s0 + $0x88] sm:$0xff]
  %v33 = vld [vmem:[%s0 + $0x90] sm:$0xff]
  %v34 = vld [vmem:[%s0 + $0x98] sm:$0xff]
  %v35 = vld [vmem:[%s0 + $0xa0] sm:$0xff]
  %v36 = vld [vmem:[%s0 + $0xa8] sm:$0xff]
  %v37 = vld [vmem:[%s0 + $0xb0] sm:$0xff]
  %v38 = vld [vmem:[%s0 + $0xb8] sm:$0xff]
  %v39 = vld [vmem:[%s0 + $0xc0] sm:$0xff]
  %v40 = vld [vmem:[%s0 + $0xc8] sm:$0xff]
  %v41 = vld [vmem:[%s0 + $0xd0] sm:$0xff]
  %v42 = vld [vmem:[%s0 + $0xd8] sm:$0xff]
  %v43 = vld [vmem:[%s0 + $0xe0] sm:$0xff]
  %v44 = vld [vmem:[%s0 + $0xe8] sm:$0xff]
  %v45 = vld [vmem:[%s0 + $0xf0] sm:$0xff]
  %v46 = vld [vmem:[%s0 + $0xf8] sm:$0xff]
  %v47 = vld [vmem:[%s0 + $0x100] sm:$0xff]
  %v48 = vld [vmem:[%s0 + $0x108] sm:$0xff]
  %v49 = vld [vmem:[%s0 + $0x110] sm:$0xff]
  %v50 = vld [vmem:[%s0 + $0x118] sm:$0xff]
  %v51 = vld [vmem:[%s0 + $0x120] sm:$0xff]
  %v52 = vld [vmem:[%s0 + $0x128] sm:$0xff]
  %v53 = vld [vmem:[%s0 + $0x130] sm:$0xff]
  %v54 = vld [vmem:[%s0 + $0x138] sm:$0xff]
  %v55 = vld [vmem:[%s0 + $0x140] sm:$0xff]
  %v56 = vld [vmem:[%s0 + $0x148] sm:$0xff]
  %v57 = vld [vmem:[%s0 + $0x150] sm:$0xff]
  %v58 = vld [vmem:[%s0 + $0x158] sm:$0xff]
  %v59 = vld [vmem:[%s0 + $0x160] sm:$0xff]
  %v60 = vld [vmem:[%s0 + $0x168] sm:$0xff]
  %v61 = vld [vmem:[%s0 + $0x170] sm:$0xff]
  %v62 = vld [vmem:[%s0 + $0x178] sm:$0xff]
  %v63 = vld [vmem:[%s0 + $0x180] sm:$0xff]
  %v64 = vld [vmem:[%s0 + $0x188] sm:$0xff]
  %v65 = vld [vmem:[%s0 + $0x190] sm:$0xff]
  %v66 = vld [vmem:[%s0 + $0x198] sm:$0xff]
  %v67 = vld [vmem:[%s0 + $0x1a0] sm:$0xff]
  %v68 = vld [vmem:[%s0 + $0x1a8] sm:$0xff]
  %v69 = vld [vmem:[%s0 + $0x1b0] sm:$0xff]
  %v70 = vld [vmem:[%s0 + $0x1b8] sm:$0xff]
  %v71 = vld [vmem:[%s0 + $0x1c0] sm:$0xff]
  %v72 = vld [vmem:[%s0 + $0x1c8] sm:$0xff]
  %v73 = vld [vmem:[%s0 + $0x1d0] sm:$0xff]
  %v74 = vld [vmem:[%s0 + $0x1d8] sm:$0xff]
  %v75 = vld [vmem:[%s0 + $0x1e0] sm:$0xff]
  %v76 = vld [vmem:[%s0 + $0x1e8] sm:$0xff]
  %v77 = vld [vmem:[%s0 + $0x1f0] sm:$0xff]
  %v78 = vld [vmem:[%s0 + $0x1f8] sm:$0xff]
  %v79 = vpack.c.bf16 %v16, %v15
  %v80 = vpack.c.bf16 %v18, %v17
  %v81 = vpack.c.bf16 %v20, %v19
  %v82 = vpack.c.bf16 %v22, %v21
  %v83 = vpack.c.bf16 %v24, %v23
  %v84 = vpack.c.bf16 %v26, %v25
  %v85 = vpack.c.bf16 %v28, %v27
  %v86 = vpack.c.bf16 %v30, %v29
  %v87 = vpack.c.bf16 %v32, %v31
  %v88 = vpack.c.bf16 %v34, %v33
  %v89 = vpack.c.bf16 %v36, %v35
  %v90 = vpack.c.bf16 %v38, %v37
  %v91 = vpack.c.bf16 %v40, %v39
  %v92 = vpack.c.bf16 %v42, %v41
  %v93 = vpack.c.bf16 %v44, %v43
  %v94 = vpack.c.bf16 %v46, %v45
  %v95 = vpack.c.bf16 %v48, %v47
  %v96 = vpack.c.bf16 %v50, %v49
  %v97 = vpack.c.bf16 %v52, %v51
  %v98 = vpack.c.bf16 %v54, %v53
  %v99 = vpack.c.bf16 %v56, %v55
  %v100 = vpack.c.bf16 %v58, %v57
  %v101 = vpack.c.bf16 %v60, %v59
  %v102 = vpack.c.bf16 %v62, %v61
  %v103 = vpack.c.bf16 %v64, %v63
  %v104 = vpack.c.bf16 %v66, %v65
  %v105 = vpack.c.bf16 %v68, %v67
  %v106 = vpack.c.bf16 %v70, %v69
  %v107 = vpack.c.bf16 %v72, %v71
  %v108 = vpack.c.bf16 %v74, %v73
  %v109 = vpack.c.bf16 %v76, %v75
  %v110 = vpack.c.bf16 %v78, %v77
  %v111 = vld [vmem:[%s1] sm:$0xf]
  %v112 = vld [vmem:[%s1 + $0x4] sm:$0xf]
  %v113 = vld [vmem:[%s2] sm:$0x1]
  %v115 = vlaneseq
  %v116 = vshrl.u32 %v115, 7
  %v117 = vsub.s32 0, %v116
  %v118 = vrot.slane %v113, %v117
  %v122 = vunpack.c.l.b16 %v111
  %v123 = vunpack.c.l.b16 %v112
  %v124 = vpack.c.b16 %v123, %v122
  %vm126 = vcmask 130048
  %v128 = vsel %vm126, %v79, 0
  %v131 = vsel %vm126, %v80, 0
  %v134 = vsel %vm126, %v81, 0
  %v137 = vsel %vm126, %v82, 0
  %v140 = vsel %vm126, %v83, 0
  %v143 = vsel %vm126, %v84, 0
  %v146 = vsel %vm126, %v85, 0
  %v149 = vsel %vm126, %v86, 0
  %v152 = vsel %vm126, %v87, 0
  %v155 = vsel %vm126, %v88, 0
  %v158 = vsel %vm126, %v89, 0
  %v161 = vsel %vm126, %v90, 0
  %v164 = vsel %vm126, %v91, 0
  %v167 = vsel %vm126, %v92, 0
  %v170 = vsel %vm126, %v93, 0
  %v173 = vsel %vm126, %v94, 0
  %v176 = vsel %vm126, %v95, 0
  %v179 = vsel %vm126, %v96, 0
  %v182 = vsel %vm126, %v97, 0
  %v185 = vsel %vm126, %v98, 0
  %v188 = vsel %vm126, %v99, 0
  %v191 = vsel %vm126, %v100, 0
  %v194 = vsel %vm126, %v101, 0
  %v197 = vsel %vm126, %v102, 0
  %v200 = vsel %vm126, %v103, 0
  %v203 = vsel %vm126, %v104, 0
  %v206 = vsel %vm126, %v105, 0
  %v209 = vsel %vm126, %v106, 0
  %v212 = vsel %vm126, %v107, 0
  %v215 = vsel %vm126, %v108, 0
  %v218 = vsel %vm126, %v109, 0
  %v221 = vsel %vm126, %v110, 0
  %223 = vmatprep.subr.bf16.mxu0 0
  %224 = vmatpush1.bf16.msra.mxu0 0
  %225 = vmatprep.subr.bf16.mxu0 0
  %226 = vmatpush1.bf16.msra.mxu0 0
  %227 = vmatprep.subr.bf16.mxu0 0
  %228 = vmatpush1.bf16.msra.mxu0 0
  %229 = vmatprep.subr.bf16.mxu0 0
  %230 = vmatpush1.bf16.msra.mxu0 0
  %231 = vmatprep.subr.bf16.mxu0 0
  %232 = vmatpush1.bf16.msra.mxu0 0
  %233 = vmatprep.subr.bf16.mxu0 0
  %234 = vmatpush1.bf16.msra.mxu0 0
  %235 = vmatprep.subr.bf16.mxu0 0
  %236 = vmatpush1.bf16.msra.mxu0 0
  %237 = vmatprep.subr.bf16.mxu0 0
  %238 = vmatpush1.bf16.msra.mxu0 %v124
  %239 = vmatprep.subr.bf16.mxu0 0
  %240 = vmatpush2.bf16.msra.mxu0 0
  %241 = vmatprep.subr.bf16.mxu0 0
  %242 = vmatpush2.bf16.msra.mxu0 0
  %243 = vmatprep.subr.bf16.mxu0 0
  %244 = vmatpush2.bf16.msra.mxu0 0
  %245 = vmatprep.subr.bf16.mxu0 0
  %246 = vmatpush2.bf16.msra.mxu0 0
  %247 = vmatprep.subr.bf16.mxu0 0
  %248 = vmatpush2.bf16.msra.mxu0 0
  %249 = vmatprep.subr.bf16.mxu0 0
  %250 = vmatpush2.bf16.msra.mxu0 0
  %251 = vmatprep.subr.bf16.mxu0 0
  %252 = vmatpush2.bf16.msra.mxu0 0
  %253 = vmatprep.subr.bf16.mxu0 0
  %254 = vmatpush2.bf16.msra.mxu0 0
  %255 = vmatprep.mubr.bf16.mxu0 0
  %256 = vmatmul.mubr.bf16.gmra.mxu0 %v128
  %v257 = vpop.f32.mrf.mxu0
  %v258 = vadd.f32 %v118, %v257
  %v259 = vpop.f32.mrf.mxu0
  %v260 = vpop.f32.mrf.mxu0
  %v261 = vadd.f32 %v118, %v260
  %v262 = vpop.f32.mrf.mxu0
  %263 = vmatprep.mubr.bf16.mxu0 0
  %264 = vmatmul.mubr.bf16.gmra.mxu0 %v131
  %v265 = vpop.f32.mrf.mxu0
  %v266 = vadd.f32 %v118, %v265
  %v267 = vpop.f32.mrf.mxu0
  %v268 = vpop.f32.mrf.mxu0
  %v269 = vadd.f32 %v118, %v268
  %v270 = vpop.f32.mrf.mxu0
  %271 = vmatprep.mubr.bf16.mxu0 0
  %272 = vmatmul.mubr.bf16.gmra.mxu0 %v134
  %v273 = vpop.f32.mrf.mxu0
  %v274 = vadd.f32 %v118, %v273
  %v275 = vpop.f32.mrf.mxu0
  %v276 = vpop.f32.mrf.mxu0
  %v277 = vadd.f32 %v118, %v276
  %v278 = vpop.f32.mrf.mxu0
  %279 = vmatprep.mubr.bf16.mxu0 0
  %280 = vmatmul.mubr.bf16.gmra.mxu0 %v137
  %v281 = vpop.f32.mrf.mxu0
  %v282 = vadd.f32 %v118, %v281
  %v283 = vpop.f32.mrf.mxu0
  %v284 = vpop.f32.mrf.mxu0
  %v285 = vadd.f32 %v118, %v284
  %v286 = vpop.f32.mrf.mxu0
  %287 = vmatprep.mubr.bf16.mxu0 0
  %288 = vmatmul.mubr.bf16.gmra.mxu0 %v140
  %v289 = vpop.f32.mrf.mxu0
  %v290 = vadd.f32 %v118, %v289
  %v291 = vpop.f32.mrf.mxu0
  %v292 = vpop.f32.mrf.mxu0
  %v293 = vadd.f32 %v118, %v292
  %v294 = vpop.f32.mrf.mxu0
  %295 = vmatprep.mubr.bf16.mxu0 0
  %296 = vmatmul.mubr.bf16.gmra.mxu0 %v143
  %v297 = vpop.f32.mrf.mxu0
  %v298 = vadd.f32 %v118, %v297
  %v299 = vpop.f32.mrf.mxu0
  %v300 = vpop.f32.mrf.mxu0
  %v301 = vadd.f32 %v118, %v300
  %v302 = vpop.f32.mrf.mxu0
  %303 = vmatprep.mubr.bf16.mxu0 0
  %304 = vmatmul.mubr.bf16.gmra.mxu0 %v146
  %v305 = vpop.f32.mrf.mxu0
  %v306 = vadd.f32 %v118, %v305
  %v307 = vpop.f32.mrf.mxu0
  %v308 = vpop.f32.mrf.mxu0
  %v309 = vadd.f32 %v118, %v308
  %v310 = vpop.f32.mrf.mxu0
  %311 = vmatprep.mubr.bf16.mxu0 0
  %312 = vmatmul.mubr.bf16.gmra.mxu0 %v149
  %v313 = vpop.f32.mrf.mxu0
  %v314 = vadd.f32 %v118, %v313
  %v315 = vpop.f32.mrf.mxu0
  %v316 = vpop.f32.mrf.mxu0
  %v317 = vadd.f32 %v118, %v316
  %v318 = vpop.f32.mrf.mxu0
  %319 = vmatprep.mubr.bf16.mxu0 0
  %320 = vmatmul.mubr.bf16.gmra.mxu0 %v152
  %v321 = vpop.f32.mrf.mxu0
  %v322 = vadd.f32 %v118, %v321
  %v323 = vpop.f32.mrf.mxu0
  %v324 = vpop.f32.mrf.mxu0
  %v325 = vadd.f32 %v118, %v324
  %v326 = vpop.f32.mrf.mxu0
  %327 = vmatprep.mubr.bf16.mxu0 0
  %328 = vmatmul.mubr.bf16.gmra.mxu0 %v155
  %v329 = vpop.f32.mrf.mxu0
  %v330 = vadd.f32 %v118, %v329
  %v331 = vpop.f32.mrf.mxu0
  %v332 = vpop.f32.mrf.mxu0
  %v333 = vadd.f32 %v118, %v332
  %v334 = vpop.f32.mrf.mxu0
  %335 = vmatprep.mubr.bf16.mxu0 0
  %336 = vmatmul.mubr.bf16.gmra.mxu0 %v158
  %v337 = vpop.f32.mrf.mxu0
  %v338 = vadd.f32 %v118, %v337
  %v339 = vpop.f32.mrf.mxu0
  %v340 = vpop.f32.mrf.mxu0
  %v341 = vadd.f32 %v118, %v340
  %v342 = vpop.f32.mrf.mxu0
  %343 = vmatprep.mubr.bf16.mxu0 0
  %344 = vmatmul.mubr.bf16.gmra.mxu0 %v161
  %v345 = vpop.f32.mrf.mxu0
  %v346 = vadd.f32 %v118, %v345
  %v347 = vpop.f32.mrf.mxu0
  %v348 = vpop.f32.mrf.mxu0
  %v349 = vadd.f32 %v118, %v348
  %v350 = vpop.f32.mrf.mxu0
  %351 = vmatprep.mubr.bf16.mxu0 0
  %352 = vmatmul.mubr.bf16.gmra.mxu0 %v164
  %v353 = vpop.f32.mrf.mxu0
  %v354 = vadd.f32 %v118, %v353
  %v355 = vpop.f32.mrf.mxu0
  %v356 = vpop.f32.mrf.mxu0
  %v357 = vadd.f32 %v118, %v356
  %v358 = vpop.f32.mrf.mxu0
  %359 = vmatprep.mubr.bf16.mxu0 0
  %360 = vmatmul.mubr.bf16.gmra.mxu0 %v167
  %v361 = vpop.f32.mrf.mxu0
  %v362 = vadd.f32 %v118, %v361
  %v363 = vpop.f32.mrf.mxu0
  %v364 = vpop.f32.mrf.mxu0
  %v365 = vadd.f32 %v118, %v364
  %v366 = vpop.f32.mrf.mxu0
  %367 = vmatprep.mubr.bf16.mxu0 0
  %368 = vmatmul.mubr.bf16.gmra.mxu0 %v170
  %v369 = vpop.f32.mrf.mxu0
  %v370 = vadd.f32 %v118, %v369
  %v371 = vpop.f32.mrf.mxu0
  %v372 = vpop.f32.mrf.mxu0
  %v373 = vadd.f32 %v118, %v372
  %v374 = vpop.f32.mrf.mxu0
  %375 = vmatprep.mubr.bf16.mxu0 0
  %376 = vmatmul.mubr.bf16.gmra.mxu0 %v173
  %v377 = vpop.f32.mrf.mxu0
  %v378 = vadd.f32 %v118, %v377
  %v379 = vpop.f32.mrf.mxu0
  %v380 = vpop.f32.mrf.mxu0
  %v381 = vadd.f32 %v118, %v380
  %v382 = vpop.f32.mrf.mxu0
  %383 = vmatprep.mubr.bf16.mxu0 0
  %384 = vmatmul.mubr.bf16.gmra.mxu0 %v176
  %v385 = vpop.f32.mrf.mxu0
  %v386 = vadd.f32 %v118, %v385
  %v387 = vpop.f32.mrf.mxu0
  %v388 = vpop.f32.mrf.mxu0
  %v389 = vadd.f32 %v118, %v388
  %v390 = vpop.f32.mrf.mxu0
  %391 = vmatprep.mubr.bf16.mxu0 0
  %392 = vmatmul.mubr.bf16.gmra.mxu0 %v179
  %v393 = vpop.f32.mrf.mxu0
  %v394 = vadd.f32 %v118, %v393
  %v395 = vpop.f32.mrf.mxu0
  %v396 = vpop.f32.mrf.mxu0
  %v397 = vadd.f32 %v118, %v396
  %v398 = vpop.f32.mrf.mxu0
  %399 = vmatprep.mubr.bf16.mxu0 0
  %400 = vmatmul.mubr.bf16.gmra.mxu0 %v182
  %v401 = vpop.f32.mrf.mxu0
  %v402 = vadd.f32 %v118, %v401
  %v403 = vpop.f32.mrf.mxu0
  %v404 = vpop.f32.mrf.mxu0
  %v405 = vadd.f32 %v118, %v404
  %v406 = vpop.f32.mrf.mxu0
  %407 = vmatprep.mubr.bf16.mxu0 0
  %408 = vmatmul.mubr.bf16.gmra.mxu0 %v185
  %v409 = vpop.f32.mrf.mxu0
  %v410 = vadd.f32 %v118, %v409
  %v411 = vpop.f32.mrf.mxu0
  %v412 = vpop.f32.mrf.mxu0
  %v413 = vadd.f32 %v118, %v412
  %v414 = vpop.f32.mrf.mxu0
  %415 = vmatprep.mubr.bf16.mxu0 0
  %416 = vmatmul.mubr.bf16.gmra.mxu0 %v188
  %v417 = vpop.f32.mrf.mxu0
  %v418 = vadd.f32 %v118, %v417
  %v419 = vpop.f32.mrf.mxu0
  %v420 = vpop.f32.mrf.mxu0
  %v421 = vadd.f32 %v118, %v420
  %v422 = vpop.f32.mrf.mxu0
  %423 = vmatprep.mubr.bf16.mxu0 0
  %424 = vmatmul.mubr.bf16.gmra.mxu0 %v191
  %v425 = vpop.f32.mrf.mxu0
  %v426 = vadd.f32 %v118, %v425
  %v427 = vpop.f32.mrf.mxu0
  %v428 = vpop.f32.mrf.mxu0
  %v429 = vadd.f32 %v118, %v428
  %v430 = vpop.f32.mrf.mxu0
  %431 = vmatprep.mubr.bf16.mxu0 0
  %432 = vmatmul.mubr.bf16.gmra.mxu0 %v194
  %v433 = vpop.f32.mrf.mxu0
  %v434 = vadd.f32 %v118, %v433
  %v435 = vpop.f32.mrf.mxu0
  %v436 = vpop.f32.mrf.mxu0
  %v437 = vadd.f32 %v118, %v436
  %v438 = vpop.f32.mrf.mxu0
  %439 = vmatprep.mubr.bf16.mxu0 0
  %440 = vmatmul.mubr.bf16.gmra.mxu0 %v197
  %v441 = vpop.f32.mrf.mxu0
  %v442 = vadd.f32 %v118, %v441
  %v443 = vpop.f32.mrf.mxu0
  %v444 = vpop.f32.mrf.mxu0
  %v445 = vadd.f32 %v118, %v444
  %v446 = vpop.f32.mrf.mxu0
  %447 = vmatprep.mubr.bf16.mxu0 0
  %448 = vmatmul.mubr.bf16.gmra.mxu0 %v200
  %v449 = vpop.f32.mrf.mxu0
  %v450 = vadd.f32 %v118, %v449
  %v451 = vpop.f32.mrf.mxu0
  %v452 = vpop.f32.mrf.mxu0
  %v453 = vadd.f32 %v118, %v452
  %v454 = vpop.f32.mrf.mxu0
  %455 = vmatprep.mubr.bf16.mxu0 0
  %456 = vmatmul.mubr.bf16.gmra.mxu0 %v203
  %v457 = vpop.f32.mrf.mxu0
  %v458 = vadd.f32 %v118, %v457
  %v459 = vpop.f32.mrf.mxu0
  %v460 = vpop.f32.mrf.mxu0
  %v461 = vadd.f32 %v118, %v460
  %v462 = vpop.f32.mrf.mxu0
  %463 = vmatprep.mubr.bf16.mxu0 0
  %464 = vmatmul.mubr.bf16.gmra.mxu0 %v206
  %v465 = vpop.f32.mrf.mxu0
  %v466 = vadd.f32 %v118, %v465
  %v467 = vpop.f32.mrf.mxu0
  %v468 = vpop.f32.mrf.mxu0
  %v469 = vadd.f32 %v118, %v468
  %v470 = vpop.f32.mrf.mxu0
  %471 = vmatprep.mubr.bf16.mxu0 0
  %472 = vmatmul.mubr.bf16.gmra.mxu0 %v209
  %v473 = vpop.f32.mrf.mxu0
  %v474 = vadd.f32 %v118, %v473
  %v475 = vpop.f32.mrf.mxu0
  %v476 = vpop.f32.mrf.mxu0
  %v477 = vadd.f32 %v118, %v476
  %v478 = vpop.f32.mrf.mxu0
  %479 = vmatprep.mubr.bf16.mxu0 0
  %480 = vmatmul.mubr.bf16.gmra.mxu0 %v212
  %v481 = vpop.f32.mrf.mxu0
  %v482 = vadd.f32 %v118, %v481
  %v483 = vpop.f32.mrf.mxu0
  %v484 = vpop.f32.mrf.mxu0
  %v485 = vadd.f32 %v118, %v484
  %v486 = vpop.f32.mrf.mxu0
  %487 = vmatprep.mubr.bf16.mxu0 0
  %488 = vmatmul.mubr.bf16.gmra.mxu0 %v215
  %v489 = vpop.f32.mrf.mxu0
  %v490 = vadd.f32 %v118, %v489
  %v491 = vpop.f32.mrf.mxu0
  %v492 = vpop.f32.mrf.mxu0
  %v493 = vadd.f32 %v118, %v492
  %v494 = vpop.f32.mrf.mxu0
  %495 = vmatprep.mubr.bf16.mxu0 0
  %496 = vmatmul.mubr.bf16.gmra.mxu0 %v218
  %v497 = vpop.f32.mrf.mxu0
  %v498 = vadd.f32 %v118, %v497
  %v499 = vpop.f32.mrf.mxu0
  %v500 = vpop.f32.mrf.mxu0
  %v501 = vadd.f32 %v118, %v500
  %v502 = vpop.f32.mrf.mxu0
  %503 = vmatprep.mubr.bf16.mxu0 0
  %504 = vmatmul.mubr.bf16.gmra.mxu0 %v221
  %v505 = vpop.f32.mrf.mxu0
  %v506 = vadd.f32 %v118, %v505
  %v507 = vpop.f32.mrf.mxu0
  %v508 = vpop.f32.mrf.mxu0
  %v509 = vadd.f32 %v118, %v508
  %v510 = vpop.f32.mrf.mxu0
  %511 = vdwg.mxu0
  %vm512 = vcmask 392192
  %513 = vst.msk [vmem:[%s3] sm:$0xff] %vm512, %v258
  %514 = vst.msk [vmem:[%s3 + $0x8] sm:$0xff] %vm512, %v261
  %515 = vst.msk [vmem:[%s3 + $0x10] sm:$0xff] %vm512, %v266
  %516 = vst.msk [vmem:[%s3 + $0x18] sm:$0xff] %vm512, %v269
  %517 = vst.msk [vmem:[%s3 + $0x20] sm:$0xff] %vm512, %v274
  %518 = vst.msk [vmem:[%s3 + $0x28] sm:$0xff] %vm512, %v277
  %519 = vst.msk [vmem:[%s3 + $0x30] sm:$0xff] %vm512, %v282
  %520 = vst.msk [vmem:[%s3 + $0x38] sm:$0xff] %vm512, %v285
  %521 = vst.msk [vmem:[%s3 + $0x40] sm:$0xff] %vm512, %v290
  %522 = vst.msk [vmem:[%s3 + $0x48] sm:$0xff] %vm512, %v293
  %523 = vst.msk [vmem:[%s3 + $0x50] sm:$0xff] %vm512, %v298
  %524 = vst.msk [vmem:[%s3 + $0x58] sm:$0xff] %vm512, %v301
  %525 = vst.msk [vmem:[%s3 + $0x60] sm:$0xff] %vm512, %v306
  %526 = vst.msk [vmem:[%s3 + $0x68] sm:$0xff] %vm512, %v309
  %527 = vst.msk [vmem:[%s3 + $0x70] sm:$0xff] %vm512, %v314
  %528 = vst.msk [vmem:[%s3 + $0x78] sm:$0xff] %vm512, %v317
  %529 = vst.msk [vmem:[%s3 + $0x80] sm:$0xff] %vm512, %v322
  %530 = vst.msk [vmem:[%s3 + $0x88] sm:$0xff] %vm512, %v325
  %531 = vst.msk [vmem:[%s3 + $0x90] sm:$0xff] %vm512, %v330
  %532 = vst.msk [vmem:[%s3 + $0x98] sm:$0xff] %vm512, %v333
  %533 = vst.msk [vmem:[%s3 + $0xa0] sm:$0xff] %vm512, %v338
  %534 = vst.msk [vmem:[%s3 + $0xa8] sm:$0xff] %vm512, %v341
  %535 = vst.msk [vmem:[%s3 + $0xb0] sm:$0xff] %vm512, %v346
  %536 = vst.msk [vmem:[%s3 + $0xb8] sm:$0xff] %vm512, %v349
  %537 = vst.msk [vmem:[%s3 + $0xc0] sm:$0xff] %vm512, %v354
  %538 = vst.msk [vmem:[%s3 + $0xc8] sm:$0xff] %vm512, %v357
  %539 = vst.msk [vmem:[%s3 + $0xd0] sm:$0xff] %vm512, %v362
  %540 = vst.msk [vmem:[%s3 + $0xd8] sm:$0xff] %vm512, %v365
  %541 = vst.msk [vmem:[%s3 + $0xe0] sm:$0xff] %vm512, %v370
  %542 = vst.msk [vmem:[%s3 + $0xe8] sm:$0xff] %vm512, %v373
  %543 = vst.msk [vmem:[%s3 + $0xf0] sm:$0xff] %vm512, %v378
  %544 = vst.msk [vmem:[%s3 + $0xf8] sm:$0xff] %vm512, %v381
  %545 = vst.msk [vmem:[%s3 + $0x100] sm:$0xff] %vm512, %v386
  %546 = vst.msk [vmem:[%s3 + $0x108] sm:$0xff] %vm512, %v389
  %547 = vst.msk [vmem:[%s3 + $0x110] sm:$0xff] %vm512, %v394
  %548 = vst.msk [vmem:[%s3 + $0x118] sm:$0xff] %vm512, %v397
  %549 = vst.msk [vmem:[%s3 + $0x120] sm:$0xff] %vm512, %v402
  %550 = vst.msk [vmem:[%s3 + $0x128] sm:$0xff] %vm512, %v405
  %551 = vst.msk [vmem:[%s3 + $0x130] sm:$0xff] %vm512, %v410
  %552 = vst.msk [vmem:[%s3 + $0x138] sm:$0xff] %vm512, %v413
  %553 = vst.msk [vmem:[%s3 + $0x140] sm:$0xff] %vm512, %v418
  %554 = vst.msk [vmem:[%s3 + $0x148] sm:$0xff] %vm512, %v421
  %555 = vst.msk [vmem:[%s3 + $0x150] sm:$0xff] %vm512, %v426
  %556 = vst.msk [vmem:[%s3 + $0x158] sm:$0xff] %vm512, %v429
  %557 = vst.msk [vmem:[%s3 + $0x160] sm:$0xff] %vm512, %v434
  %558 = vst.msk [vmem:[%s3 + $0x168] sm:$0xff] %vm512, %v437
  %559 = vst.msk [vmem:[%s3 + $0x170] sm:$0xff] %vm512, %v442
  %560 = vst.msk [vmem:[%s3 + $0x178] sm:$0xff] %vm512, %v445
  %561 = vst.msk [vmem:[%s3 + $0x180] sm:$0xff] %vm512, %v450
  %562 = vst.msk [vmem:[%s3 + $0x188] sm:$0xff] %vm512, %v453
  %563 = vst.msk [vmem:[%s3 + $0x190] sm:$0xff] %vm512, %v458
  %564 = vst.msk [vmem:[%s3 + $0x198] sm:$0xff] %vm512, %v461
  %565 = vst.msk [vmem:[%s3 + $0x1a0] sm:$0xff] %vm512, %v466
  %566 = vst.msk [vmem:[%s3 + $0x1a8] sm:$0xff] %vm512, %v469
  %567 = vst.msk [vmem:[%s3 + $0x1b0] sm:$0xff] %vm512, %v474
  %568 = vst.msk [vmem:[%s3 + $0x1b8] sm:$0xff] %vm512, %v477
  %569 = vst.msk [vmem:[%s3 + $0x1c0] sm:$0xff] %vm512, %v482
  %570 = vst.msk [vmem:[%s3 + $0x1c8] sm:$0xff] %vm512, %v485
  %571 = vst.msk [vmem:[%s3 + $0x1d0] sm:$0xff] %vm512, %v490
  %572 = vst.msk [vmem:[%s3 + $0x1d8] sm:$0xff] %vm512, %v493
  %573 = vst.msk [vmem:[%s3 + $0x1e0] sm:$0xff] %vm512, %v498
  %574 = vst.msk [vmem:[%s3 + $0x1e8] sm:$0xff] %vm512, %v501
  %575 = vst.msk [vmem:[%s3 + $0x1f0] sm:$0xff] %vm512, %v506
  %576 = vst.msk [vmem:[%s3 + $0x1f8] sm:$0xff] %vm512, %v509
  // Predicated region
  $region14: #{tpu_custom_call.1} parent=0 // pred_check
    _
  $region15: #{tpu_custom_call.1} parent=0 // pred_check_branch
    %578 = sbr.rel (0) target = $region17
  $region16: #{tpu_custom_call.1} parent=0 // pred_region
    _
  $region17: #{tpu_custom_call.1} parent=0 // pred_fallthru
    _
  // Predicated region
  $region18: #{tpu_custom_call.1} parent=0 // pred_check
    _
  $region19: #{tpu_custom_call.1} parent=0 // pred_check_branch
    %580 = sbr.rel (0) target = $region21
  $region20: #{tpu_custom_call.1} parent=0 // pred_region
    _
  $region21: #{tpu_custom_call.1} parent=0 // pred_fallthru
    _

</llo_original>
